<compile_context>
chip_gen: v6e
topology: v6e:2x2x1
jax: 0.10.0
libtpu: 0.0.40
codegen_flags: <defaults>
</compile_context>

<pallas_src>
import functools

import jax
import jax.numpy as jnp
from jax.experimental import pallas as pl
from jax.experimental.pallas import tpu as pltpu


# ----------------------------- Pallas kernel --------------------------------
def _ranking_loss_kernel(iA_ref, iB_ref, tA_ref, tB_ref, out_ref, *,
                         sigma, alpha, eps, loss_weight, mask_value):
    """Ranking loss over lane-dense (rows, 128) per-pair fields.

    The consistency & pair-validity mask is recomputed here from the gathered
    targets: invalid pixels, explicitly-masked pairs and tail padding all
    carry tA <= mask_value (or tB <= mask_value), so no mask field is DMA'd.
    """
    iA = iA_ref[...]
    iB = iB_ref[...]
    tA = tA_ref[...]
    tB = tB_ref[...]

    thr = jnp.float32(mask_value)
    cons = (tA > thr) & (tB > thr)

    hi = jnp.float32(1.0 + sigma)
    lo = jnp.float32(1.0 / (1.0 + sigma))

    ratio = tA / (tB + jnp.float32(eps))
    mask_eq = (ratio < hi) & (ratio > lo)
    labels = jnp.where(ratio >= hi, jnp.float32(1.0),
                       jnp.where(ratio <= lo, jnp.float32(-1.0),
                                 jnp.float32(0.0)))

    diff = iA - iB
    # Stable softplus: log(1 + exp(x)) = max(x, 0) + log1p(exp(-|x|)).
    x = (iB - iA) * labels
    softplus = (jnp.maximum(x, jnp.float32(0.0)) +
                jnp.log1p(jnp.exp(-jnp.abs(x))))

    # equal / unequal branches are disjoint on mask_eq -> single select.
    per_pair = jnp.where(mask_eq, jnp.float32(alpha) * diff * diff, softplus)
    loss_terms = jnp.where(cons, per_pair, jnp.float32(0.0))

    num = jnp.sum(loss_terms)
    count = jnp.sum(cons.astype(jnp.float32))

    out_ref[0, 0] = num / (count + jnp.float32(eps)) * jnp.float32(loss_weight)


# ------------------------------ JAX glue -------------------------------------
def _sample_pair_indices(targ_row, key, *, threshold, sample_num):
    """Static-shape analogue of torch's masked_select + randperm pairing.

    Takes the 2*sample_num largest iid-uniform keys among valid pixels
    (lax.top_k, O(L*k)) -> uniform random subset in uniform random order.
    Pairs that land on invalid pixels (only when #valid < 2*sample_num) are
    neutralized later by the in-kernel validity test on the gathered targets.
    """
    valid = targ_row > threshold
    rnd = jax.random.uniform(key, targ_row.shape, dtype=jnp.float32)
    scores = jnp.where(valid, rnd, -jnp.inf)
    _, idx = jax.lax.top_k(scores, 2 * sample_num)
    return idx


def ranking_loss(prediction, target, mask=None, *, point_pairs=5000, sigma=0.03,
                 alpha=1.0, mask_value=-1e-08, loss_weight=1.0, eps=1e-06,
                 key=None):
    if key is None:
        key = jax.random.PRNGKey(42)

    n = target.shape[0]
    pred = prediction.reshape(n, -1).astype(jnp.float32)
    targ = target.reshape(n, -1).astype(jnp.float32)
    L = targ.shape[1]

    # TODO(synk): torch's randomSampling silently draws fewer pairs when
    # #valid < 2*point_pairs (dynamic shapes); here sample_num is clamped to a
    # static bound and under-sampled pairs are zeroed via the validity mask.
    S = min(point_pairs, L // 2)

    keys = jax.random.split(key, n)
    idx = jax.vmap(functools.partial(_sample_pair_indices, threshold=mask_value,
                                     sample_num=S))(targ, keys)        # (n, 2S)

    # Two gathers (pred, targ) over the interleaved index array, even/odd split.
    pred_pairs = jnp.take_along_axis(pred, idx, axis=1)
    targ_pairs = jnp.take_along_axis(targ, idx, axis=1)
    iA, iB = pred_pairs[:, 0::2], pred_pairs[:, 1::2]
    tA, tB = targ_pairs[:, 0::2], targ_pairs[:, 1::2]

    if mask is not None:
        msk = mask.reshape(n, -1)
        msk_pairs = jnp.take_along_axis(msk, idx, axis=1)
        pair_mask = msk_pairs[:, 0::2] & msk_pairs[:, 1::2]
        # Fold the explicit consistency mask into tA: masked pairs fail the
        # strict (tA > mask_value) test in the kernel and contribute nothing.
        tA = jnp.where(pair_mask, tA, jnp.float32(mask_value))

    # Lane-dense layout: flatten all pairs, pad only the tail, reshape to
    # (rows, 128).  Padded pairs carry tA == mask_value -> cons == 0.
    P = n * S
    rows = max(1, -(-P // 128))
    P_pad = rows * 128
    pad = P_pad - P

    def _dense(x, fill):
        x = x.reshape(-1)
        if pad:
            x = jnp.pad(x, (0, pad), constant_values=fill)
        return x.reshape(rows, 128)

    iA_d = _dense(iA, 0.0)
    iB_d = _dense(iB, 0.0)
    tA_d = _dense(tA, mask_value)
    tB_d = _dense(tB, 1.0)

    kernel = functools.partial(_ranking_loss_kernel, sigma=sigma, alpha=alpha,
                               eps=eps, loss_weight=loss_weight,
                               mask_value=mask_value)

    cost = pl.CostEstimate(flops=16 * P_pad,
                           transcendentals=2 * P_pad,
                           bytes_accessed=4 * P_pad * 4 + 4)

    # grid=() on purpose: per-grid-step overhead would exceed the whole
    # compute at typical pair counts; scalar result goes to SMEM.
    out = pl.pallas_call(
        kernel,
        out_shape=jax.ShapeDtypeStruct((1, 1), jnp.float32),
        in_specs=[pl.BlockSpec(memory_space=pltpu.MemorySpace.VMEM)] * 4,
        out_specs=pl.BlockSpec(memory_space=pltpu.MemorySpace.SMEM),
        cost_estimate=cost,
    )(iA_d, iB_d, tA_d, tB_d)

    # TODO(synk): torch raises RuntimeError on a NaN/Inf loss; a kernel cannot
    # raise host-side, so callers should check the returned scalar if needed.
    return out[0, 0]


# ------------------------------- demo ----------------------------------------
if __name__ == "__main__":
    key = jax.random.PRNGKey(0)
    k_pred, k_targ, k_samp = jax.random.split(key, 3)

    n, c, h, w = 2, 1, 16, 16                      # NCHW, like the torch module
    prediction = jax.random.normal(k_pred, (n, c, h, w), dtype=jnp.float32)
    # strictly positive depths -> every pixel passes the mask_value threshold
    target = jax.random.uniform(k_targ, (n, c, h, w), dtype=jnp.float32,
                                minval=0.1, maxval=2.0)

    loss_fn = jax.jit(functools.partial(ranking_loss, point_pairs=64,
                                        sigma=0.03, alpha=1.0,
                                        mask_value=-1e-08, loss_weight=1.0))
    loss = loss_fn(prediction, target, key=k_samp)
    loss = jax.block_until_ready(loss)
    assert jnp.isfinite(loss)
    print("KERNEL_OK")
</pallas_src>

<mosaic_0001>
module attributes {stable_mosaic.version = 11 : i64} {
  func.func @_ranking_loss_kernel(%arg0: memref<1x128xf32, #tpu.memory_space<vmem>>, %arg1: memref<1x128xf32, #tpu.memory_space<vmem>>, %arg2: memref<1x128xf32, #tpu.memory_space<vmem>>, %arg3: memref<1x128xf32, #tpu.memory_space<vmem>>, %arg4: memref<1x1xf32, #tpu.memory_space<smem>>) attributes {dimension_semantics = [], scalar_prefetch = 0 : i64, scratch_operands = 0 : i64, tpu.core_type = #tpu.core_type<tc>} {
    %c0 = arith.constant 0 : index
    %c0_0 = arith.constant 0 : index
    %0 = vector.load %arg0[%c0, %c0_0] : memref<1x128xf32, #tpu.memory_space<vmem>>, vector<1x128xf32>
    %c0_1 = arith.constant 0 : index
    %c0_2 = arith.constant 0 : index
    %1 = vector.load %arg1[%c0_1, %c0_2] : memref<1x128xf32, #tpu.memory_space<vmem>>, vector<1x128xf32>
    %c0_3 = arith.constant 0 : index
    %c0_4 = arith.constant 0 : index
    %2 = vector.load %arg2[%c0_3, %c0_4] : memref<1x128xf32, #tpu.memory_space<vmem>>, vector<1x128xf32>
    %c0_5 = arith.constant 0 : index
    %c0_6 = arith.constant 0 : index
    %3 = vector.load %arg3[%c0_5, %c0_6] : memref<1x128xf32, #tpu.memory_space<vmem>>, vector<1x128xf32>
    %cst = arith.constant -9.99999993E-9 : f32
    %4 = vector.broadcast %cst : f32 to vector<1x128xf32>
    %5 = arith.cmpf ogt, %2, %4 : vector<1x128xf32>
    %cst_7 = arith.constant -9.99999993E-9 : f32
    %6 = vector.broadcast %cst_7 : f32 to vector<1x128xf32>
    %7 = arith.cmpf ogt, %3, %6 : vector<1x128xf32>
    %8 = arith.andi %5, %7 : vector<1x128xi1>
    %cst_8 = arith.constant 9.99999997E-7 : f32
    %9 = vector.broadcast %cst_8 : f32 to vector<1x128xf32>
    %10 = arith.addf %3, %9 : vector<1x128xf32>
    %11 = arith.divf %2, %10 : vector<1x128xf32>
    %cst_9 = arith.constant 1.030000e+00 : f32
    %12 = vector.broadcast %cst_9 : f32 to vector<1x128xf32>
    %13 = arith.cmpf olt, %11, %12 : vector<1x128xf32>
    %cst_10 = arith.constant 0.970873773 : f32
    %14 = vector.broadcast %cst_10 : f32 to vector<1x128xf32>
    %15 = arith.cmpf ogt, %11, %14 : vector<1x128xf32>
    %16 = arith.andi %13, %15 : vector<1x128xi1>
    %cst_11 = arith.constant 1.030000e+00 : f32
    %17 = vector.broadcast %cst_11 : f32 to vector<1x128xf32>
    %18 = arith.cmpf oge, %11, %17 : vector<1x128xf32>
    %cst_12 = arith.constant 0.970873773 : f32
    %19 = vector.broadcast %cst_12 : f32 to vector<1x128xf32>
    %20 = arith.cmpf ole, %11, %19 : vector<1x128xf32>
    %cst_13 = arith.constant -1.000000e+00 : f32
    %cst_14 = arith.constant 0.000000e+00 : f32
    %21 = vector.broadcast %cst_13 : f32 to vector<1x128xf32>
    %22 = vector.broadcast %cst_14 : f32 to vector<1x128xf32>
    %23 = arith.select %20, %21, %22 : vector<1x128xi1>, vector<1x128xf32>
    %cst_15 = arith.constant 1.000000e+00 : f32
    %24 = vector.broadcast %cst_15 : f32 to vector<1x128xf32>
    %25 = arith.select %18, %24, %23 : vector<1x128xi1>, vector<1x128xf32>
    %26 = arith.subf %0, %1 : vector<1x128xf32>
    %27 = arith.subf %1, %0 : vector<1x128xf32>
    %28 = arith.mulf %27, %25 : vector<1x128xf32>
    %cst_16 = arith.constant 0.000000e+00 : f32
    %29 = vector.broadcast %cst_16 : f32 to vector<1x128xf32>
    %30 = arith.maximumf %28, %29 : vector<1x128xf32>
    %31 = math.absf %28 : vector<1x128xf32>
    %cst_17 = arith.constant 0.000000e+00 : f32
    %32 = vector.broadcast %cst_17 : f32 to vector<1x128xf32>
    %33 = arith.subf %32, %31 : vector<1x128xf32>
    %34 = math.exp %33 : vector<1x128xf32>
    %35 = math.log1p %34 : vector<1x128xf32>
    %36 = arith.addf %30, %35 : vector<1x128xf32>
    %cst_18 = arith.constant 1.000000e+00 : f32
    %37 = vector.broadcast %cst_18 : f32 to vector<1x128xf32>
    %38 = arith.mulf %37, %26 : vector<1x128xf32>
    %39 = arith.mulf %38, %26 : vector<1x128xf32>
    %40 = arith.select %16, %39, %36 : vector<1x128xi1>, vector<1x128xf32>
    %cst_19 = arith.constant 0.000000e+00 : f32
    %41 = vector.broadcast %cst_19 : f32 to vector<1x128xf32>
    %42 = arith.select %8, %40, %41 : vector<1x128xi1>, vector<1x128xf32>
    %43 = vector.shape_cast %42 : vector<1x128xf32> to vector<1x1x128xf32>
    %cst_20 = arith.constant dense<0.000000e+00> : vector<1xf32>
    %44 = vector.multi_reduction <add>, %43, %cst_20 [1, 2] : vector<1x1x128xf32> to vector<1xf32>
    %45 = vector.shape_cast %44 : vector<1xf32> to vector<1x1x1xf32>
    %46 = vector.extract %45[0, 0, 0] : f32 from vector<1x1x1xf32>
    %47 = arith.extui %8 : vector<1x128xi1> to vector<1x128xi32>
    %48 = arith.sitofp %47 : vector<1x128xi32> to vector<1x128xf32>
    %49 = vector.shape_cast %48 : vector<1x128xf32> to vector<1x1x128xf32>
    %cst_21 = arith.constant dense<0.000000e+00> : vector<1xf32>
    %50 = vector.multi_reduction <add>, %49, %cst_21 [1, 2] : vector<1x1x128xf32> to vector<1xf32>
    %51 = vector.shape_cast %50 : vector<1xf32> to vector<1x1x1xf32>
    %52 = vector.extract %51[0, 0, 0] : f32 from vector<1x1x1xf32>
    %cst_22 = arith.constant 9.99999997E-7 : f32
    %53 = arith.addf %52, %cst_22 : f32
    %54 = arith.divf %46, %53 : f32
    %cst_23 = arith.constant 1.000000e+00 : f32
    %55 = arith.mulf %54, %cst_23 : f32
    %c0_24 = arith.constant 0 : index
    %c0_25 = arith.constant 0 : index
    %56 = memref.load %arg4[%c0_24, %c0_25] : memref<1x1xf32, #tpu.memory_space<smem>>
    memref.store %55, %arg4[%c0_24, %c0_25] : memref<1x1xf32, #tpu.memory_space<smem>>
    return
  }
}

</mosaic_0001>

<llo_original>
// kernel: ranking_loss.3
$region0: #{ranking_loss.3}
  #allocation0 [shape = 'u32[]', space=smem, size = 0x4, offset = 0x4, fixed_abs, tag = 'smem constant byte address 0x4 - core index']
  #allocation1 [shape = 'u32[144,128]{1,0:T(1,128)}', space=vmem, size = 0x12000, scoped, tag = 'internal scratch']
  %s0 = inlined_call_operand.vmem [shape: f32[1,128], index: 0, kind: input, shape index: {}]
  %s1 = inlined_call_operand.vmem [shape: f32[1,128], index: 1, kind: input, shape index: {}]
  %s2 = inlined_call_operand.vmem [shape: f32[1,128], index: 2, kind: input, shape index: {}]
  %s3 = inlined_call_operand.vmem [shape: f32[1,128], index: 3, kind: input, shape index: {}]
  %s4 = inlined_call_operand.hbm [shape: f32[1,1], index: 4, kind: output, shape index: {}]
  %s5 = sld [smem:[#allocation0]]
  $region26: #{ranking_loss.3} parent=0
    _
  %s7 = ssub.s32 1, %s5
  %s8 = scalar_select 0, %s7, %s5
  $region1: #{ranking_loss.3} parent=0
    #allocation2 [shape = 'u8[512]{0}', space=smem, size = 0x200, scoped, tag = 'output window, operand 0, single buffered']
    #allocation3 [shape = 's32[1]{0}', space=sflag, size = 0x4, scoped, tag = 'scoped memory for ranking_loss.3']
    %9 = vsyncpa [#allocation3], 0
    // Predicated region
    $region2: #{ranking_loss.3} parent=1 // pred_check
      _
    $region3: #{ranking_loss.3} parent=1 // pred_check_branch
      %11 = sbr.rel (0) target = $region5
    $region4: #{ranking_loss.3} parent=1 // pred_region
      _
    $region5: #{ranking_loss.3} parent=1 // pred_fallthru
      _
    // Predicated region
    $region6: #{ranking_loss.3} parent=1 // pred_check
      _
    $region7: #{ranking_loss.3} parent=1 // pred_check_branch
      %13 = sbr.rel (0) target = $region9
    $region8: #{ranking_loss.3} parent=1 // pred_region
      _
    $region9: #{ranking_loss.3} parent=1 // pred_fallthru
      _
    // Predicated region
    $region10: #{ranking_loss.3} parent=1 // pred_check
      _
    $region11: #{ranking_loss.3} parent=1 // pred_check_branch
      %15 = sbr.rel (0) target = $region13
    $region12: #{ranking_loss.3} parent=1 // pred_region
      _
    $region13: #{ranking_loss.3} parent=1 // pred_fallthru
      _
    // Predicated region
    $region14: #{ranking_loss.3} parent=1 // pred_check
      _
    $region15: #{ranking_loss.3} parent=1 // pred_check_branch
      %17 = sbr.rel (0) target = $region17
    $region16: #{ranking_loss.3} parent=1 // pred_region
      _
    $region17: #{ranking_loss.3} parent=1 // pred_fallthru
      _
    %v18 = vld [vmem:[%s0] sm:$0x1]
    %v19 = vld [vmem:[%s1] sm:$0x1]
    %v20 = vld [vmem:[%s2] sm:$0x1]
    %v21 = vld [vmem:[%s3] sm:$0x1]
    %vm22 = vcmp.gt.f32.partialorder %v20, -1e-08
    %vm23 = vcmp.gt.f32.partialorder %v21, -1e-08
    %vm24 = vmand %vm22, %vm23
    %v25 = vadd.f32 %v21, 1e-06
    %v26 = vrcp.pop %v25
    %v27 = vmul.f32 %v20, %v26
    %vm28 = vcmp.lt.f32.partialorder %v27, 1.03
    %vm29 = vcmp.gt.f32.partialorder %v27, 0.9708738
    %vm30 = vmand %vm28, %vm29
    %vm31 = vcmp.ge.f32.partialorder %v27, 1.03
    %vm32 = vcmp.le.f32.partialorder %v27, 0.9708738
    %v33 = vsel %vm32, -1.0, 0.0
    %v34 = vsel %vm31, 1.0, %v33
    %v35 = vsub.f32 %v18, %v19
    %v36 = vsub.f32 %v19, %v18
    %v37 = vmul.f32 %v36, %v34
    %v38 = vmax.f32 %v37, 0.0
    %v39 = vand.u32 2147483647, %v37
    %v40 = vsub.f32 0.0, %v39
    %v41 = vmul.f32 %v40, 1.442695
    %v42 = vpow.pop %v41
    %v43 = vadd.f32 %v42, 1.0
    %v44 = vlog2.pop %v43
    %v45 = vmul.f32 %v44, 0.6931472
    %v46 = vmul.f32 -0.5, %v42
    %v47 = vadd.f32 %v46, 1.0
    %v48 = vmul.f32 %v47, %v42
    %v49 = vand.u32 2147483647, %v42
    %vm50 = vcmp.lt.f32.partialorder %v49, 0.0004427343
    %v51 = vsel %vm50, %v48, %v45
    %v52 = vadd.f32 %v38, %v51
    %v53 = vmul.f32 %v35, %v35
    %v54 = vsel %vm30, %v53, %v52
    %v55 = vsel %vm24, %v54, 0.0
    %vm56 = vcmask 1040384
    %v57 = vsel %vm56, %v55, 0.0
    %58 = vadd.xlane.f32.xlu0 %v57
    %v59 = vpop.xlane.xlu0 %58
    %v60 = vrot.slane %v59, 4
    %v61 = vadd.f32 %v59, %v60
    %v62 = vrot.slane %v61, 2
    %v63 = vadd.f32 %v61, %v62
    %v64 = vrot.slane %v63, 1
    %v65 = vadd.f32 %v63, %v64
    %s66 = vtos %v65
    %v67 = vsel %vm24, 1, 0
    %v68 = vcvt.s32.f32 %v67
    %v69 = vsel %vm56, %v68, 0.0
    %70 = vadd.xlane.f32.xlu0 %v69
    %v71 = vpop.xlane.xlu0 %70
    %v72 = vrot.slane %v71, 4
    %v73 = vadd.f32 %v71, %v72
    %v74 = vrot.slane %v73, 2
    %v75 = vadd.f32 %v73, %v74
    %v76 = vrot.slane %v75, 1
    %v77 = vadd.f32 %v75, %v76
    %s78 = vtos %v77
    %s79 = sadd.f32 %s78, 1e-06
    %v80 = vstv %s79
    %v81 = vrcp.pop %v80
    %s82 = vtos %v81
    %s83 = smul.f32 %s66, %s82
    %s84 = scalar_lea.smem [#allocation2], 0
    %85 = sst [smem:[%s84]] %s83
    // Predicated region
    $region18: #{ranking_loss.3} parent=1 // pred_check
      _
    $region19: #{ranking_loss.3} parent=1 // pred_check_branch
      %87 = sbr.rel (0) target = $region21
    $region20: #{ranking_loss.3} parent=1 // pred_region
      %s89 = ssub.s32 16, 16
      %90 = vsyncadd [#allocation3], %s89
      %93 = dma.smem_to_hbm [#allocation2], 16, %s4, [#allocation3]
    $region21: #{ranking_loss.3} parent=1 // pred_fallthru
      _
    // Predicated region
    $region22: #{ranking_loss.3} parent=1 // pred_check
      _
    $region23: #{ranking_loss.3} parent=1 // pred_check_branch
      %95 = sbr.rel (0) target = $region25
    $region24: #{ranking_loss.3} parent=1 // pred_region
      %96 = dma.done [#allocation3], 16
    $region25: #{ranking_loss.3} parent=1 // pred_fallthru
      _
    %97 = sfence
    %98 = vsyncpa [#allocation3], 1

</llo_original>
